<compile_context>
chip_gen: v7x
topology: tpu7x:2x2x1
jax: 0.10.0
libtpu: 0.0.40
codegen_flags: <defaults>
</compile_context>

<pallas_src>
import jax
import jax.numpy as jnp
from jax import lax
from jax.experimental import pallas as pl
from jax.experimental.pallas import tpu as pltpu

_LANE = 128
_SUBLANE = 8
_ROW_GRANULE = 16          # keeps tiles legal for bf16 sublane packing too


def _device_kind():
    try:
        return jax.devices()[0].device_kind.lower()
    except Exception:
        return ""


_IS_MULTI_TC = "v7" in _device_kind()              # v7x: 2 TensorCores / chip
_NSHARD = 2 if _IS_MULTI_TC else 1                 # no shard axis on 1-TC chips
_MAX_TILE_ROWS = 8192 if _IS_MULTI_TC else 2048    # 4 MiB vs 1 MiB f32 / input block
_VMEM_LIMIT_BYTES = (48 if _IS_MULTI_TC else 32) * 1024 * 1024


# ----------------------------------------------------------------- helpers --

def _cdiv(a, b):
    return -(-a // b)


def _round_up(a, b):
    return _cdiv(a, b) * b


def _padded_rows(n):
    """Number of 128-lane rows used for an n-element vector."""
    rows = _cdiv(n, _LANE)
    if rows <= _MAX_TILE_ROWS:
        # Small arrays: round the row count up so the single tile exactly
        # matches the array (tiny one-time pad, latency-bound regime anyway).
        rows = _round_up(max(rows, 1), _ROW_GRANULE)
    return rows


def _to_lane_rows(x, rows):
    """Lane-dense (rows, 128) view of x. Free (pure reshape) when
    x.size == rows * 128; otherwise zero-pads the tail."""
    flat = x.reshape(-1)
    pad = rows * _LANE - flat.size
    if pad:
        flat = jnp.pad(flat, (0, pad))
    return flat.reshape(rows, _LANE)


# ------------------------------------------------------------- elementwise --

def _sq_err(x, t):
    d = x - t
    return d * d


def _bce_logits(x, t):
    # Numerically stable BCE-with-logits: max(x,0) - x*t + log(1 + exp(-|x|)).
    # TODO(synk): on v7x, profile EUP occupancy; the 2 transcendentals/elem can
    # move to bf16 if tolerance allows (v5e has no bf16 EUP).
    return jnp.maximum(x, 0.0) - x * t + jnp.log(1.0 + jnp.exp(-jnp.abs(x)))


# ------------------------------------------------------------------ kernel --

def _make_reduce_kernel(elem_fn, tile_rows, tiles_per_shard, scalar_out):
    tile_elems = tile_rows * _LANE

    def _accumulate(acc_ref, contrib):
        # Pure VPU vreg adds into the (8,128) accumulator.
        acc_ref[...] += jnp.sum(
            contrib.reshape(tile_rows // _SUBLANE, _SUBLANE, _LANE), axis=0)

    def kernel(nvalid_ref, pred_ref, tgt_ref, out_ref, acc_ref):
        s = pl.program_id(0)           # shard axis (size 1 on 1-TC chips)
        i = pl.program_id(1)           # tile / reduction axis

        @pl.when(i == 0)
        def _():
            acc_ref[...] = jnp.zeros_like(acc_ref)

        x = pred_ref[...].astype(jnp.float32)
        t = tgt_ref[...].astype(jnp.float32)
        contrib = elem_fn(x, t)

        nvalid = nvalid_ref[0]
        base = (s * tiles_per_shard + i) * tile_elems

        # Fully-valid tiles (the common case): accumulate directly, no mask.
        @pl.when(base + tile_elems <= nvalid)
        def _():
            _accumulate(acc_ref, contrib)

        # Boundary / overhang tiles only: mask tile-local indices against
        # (nvalid - base).  Garbage rows of a partial last block are zeroed
        # BEFORE accumulation (jnp.where is a true select; NaN/Inf don't leak).
        @pl.when(base + tile_elems > nvalid)
        def _():
            row = lax.broadcasted_iota(jnp.int32, (tile_rows, _LANE), 0)
            lane = lax.broadcasted_iota(jnp.int32, (tile_rows, _LANE), 1)
            local = row * _LANE + lane
            _accumulate(acc_ref, jnp.where(local < nvalid - base, contrib, 0.0))

        @pl.when(i == tiles_per_shard - 1)
        def _():
            if scalar_out:
                # In-kernel cross-lane reduce (XLU slot is idle, runs once);
                # scalar lands in SMEM -> no epilogue reduce kernel needed.
                out_ref[0, 0] = jnp.sum(acc_ref[...])
            else:
                out_ref[...] = acc_ref[...].reshape(1, _SUBLANE, _LANE)

    return kernel


# ---------------------------------------------------------------- wrappers --

def _pallas_reduce_sum(elem_fn, pred2d, tgt2d, nvalid):
    """Sum of elem_fn(pred, tgt) over the first `nvalid` flat elements."""
    rows = pred2d.shape[0]
    tile_rows = min(_MAX_TILE_ROWS, rows)      # rows is a x16 multiple when <= max
    total_tiles = _cdiv(rows, tile_rows)       # last tile may be partial
    tiles_per_shard = _cdiv(total_tiles, _NSHARD)
    scalar_out = _NSHARD == 1

    kernel = _make_reduce_kernel(elem_fn, tile_rows, tiles_per_shard, scalar_out)

    def in_map(s, i, nvalid_ref):
        # Clamp so overhang tiles of an uneven shard split just re-read the
        # last valid tile; their contribution is masked to zero in-kernel.
        return (jnp.minimum(s * tiles_per_shard + i, total_tiles - 1), 0)

    in_spec = pl.BlockSpec((tile_rows, _LANE), in_map)

    if scalar_out:
        out_shape = jax.ShapeDtypeStruct((1, 1), jnp.float32)
        out_spec = pl.BlockSpec(memory_space=pltpu.MemorySpace.SMEM)
    else:
        out_shape = jax.ShapeDtypeStruct((_NSHARD, _SUBLANE, _LANE), jnp.float32)
        out_spec = pl.BlockSpec((1, _SUBLANE, _LANE), lambda s, i, nv: (s, 0, 0))

    grid_spec = pltpu.PrefetchScalarGridSpec(
        num_scalar_prefetch=1,
        grid=(_NSHARD, tiles_per_shard),
        in_specs=[in_spec, in_spec],
        out_specs=out_spec,
        scratch_shapes=[pltpu.VMEM((_SUBLANE, _LANE), jnp.float32)],
    )

    # TODO(synk): on v7x, confirm in a profile that the leading "parallel"
    # shard axis really splits across both TensorCores; switch to
    # pltpu.CORE_PARALLEL / core_map if it does not.
    out = pl.pallas_call(
        kernel,
        out_shape=out_shape,
        grid_spec=grid_spec,
        compiler_params=pltpu.CompilerParams(
            dimension_semantics=(
                "parallel" if _NSHARD > 1 else "arbitrary", "arbitrary"),
            vmem_limit_bytes=_VMEM_LIMIT_BYTES,
        ),
    )(nvalid, pred2d, tgt2d)

    if scalar_out:
        return out.reshape(())     # free bitcast; no extra XLA reduce launch
    return jnp.sum(out)            # tiny (NSHARD,8,128) epilogue, v7x only


@jax.jit
def _loss_regressor_impl(pred2d, targets):
    n = targets.size
    tgt2d = _to_lane_rows(targets, pred2d.shape[0])
    nvalid = jnp.full((1,), n, dtype=jnp.int32)
    sq_sum = _pallas_reduce_sum(_sq_err, pred2d, tgt2d, nvalid)
    # F.mse_loss(..., reduction='mean') * targets.shape[0]
    return sq_sum * (float(targets.shape[0]) / float(n))


@jax.jit
def _loss_classifier_impl(pred2d, targets):
    n = targets.size
    tgt2d = _to_lane_rows(targets, pred2d.shape[0])
    nvalid = jnp.full((1,), n, dtype=jnp.int32)
    bce_sum = _pallas_reduce_sum(_bce_logits, pred2d, tgt2d, nvalid)
    # len(targets) * F.binary_cross_entropy(sigmoid(x), targets, 'mean')
    return bce_sum * (float(targets.shape[0]) / float(n))


class ResidualsCalculator:
    """JAX/Pallas port of the PyTorch ResidualsCalculator module."""

    def __init__(self, predicted_values, type):
        self.type = type
        # nn.Parameter initialised with the provided tensor (dtype preserved;
        # the kernel upcasts to f32 in VMEM).
        self.predicted_values = jnp.asarray(predicted_values)
        n = self.predicted_values.size
        if n >= 2 ** 31 - _MAX_TILE_ROWS * _LANE:
            raise NotImplementedError(
                "int32 flat indexing in the kernel mask limits inputs to < 2^31 elems")
        self._n = n
        # Lane-dense (rows, 128) view of the parameter, padded ONCE and cached
        # so loss calls never re-copy it through HBM.
        self._pred2d = _to_lane_rows(self.predicted_values, _padded_rows(n))

    def forward(self):
        # Returns the parameter itself; an identity-copy kernel would only add
        # an HBM round trip.
        return self.predicted_values

    def loss(self, targets):
        if self.type == 'regressor':
            return self.loss_regressor(targets)
        elif self.type == 'classifier':
            return self.loss_classifier(targets)
        else:
            raise Exception('Not supported')

    def loss_regressor(self, targets):
        targets = jnp.asarray(targets)
        assert targets.size == self._n, "targets must match predicted_values size"
        return _loss_regressor_impl(self._pred2d, targets)

    def loss_classifier(self, targets):
        targets = jnp.asarray(targets)
        assert targets.size == self._n, "targets must match predicted_values size"
        return _loss_classifier_impl(self._pred2d, targets)


# ------------------------------------------------------------------- main ---

if __name__ == "__main__":
    key = jax.random.PRNGKey(0)
    k1, k2, k3, k4, k5, k6 = jax.random.split(key, 6)

    # --- Small case: N deliberately NOT a multiple of 128 (tail-mask path). --
    N = 1000
    predicted_values = jax.random.normal(k1, (N,), dtype=jnp.float32)
    reg_targets = jax.random.normal(k2, (N,), dtype=jnp.float32)
    cls_targets = (jax.random.uniform(k3, (N,)) > 0.5).astype(jnp.float32)

    reg = ResidualsCalculator(predicted_values, 'regressor')
    fwd = reg.forward()
    loss_r = reg.loss(reg_targets)

    cls = ResidualsCalculator(predicted_values, 'classifier')
    loss_c = cls.loss(cls_targets)

    jax.block_until_ready((fwd, loss_r, loss_c))

    assert jnp.allclose(fwd, predicted_values)
    ref_r = jnp.mean((predicted_values - reg_targets) ** 2) * N
    assert jnp.allclose(loss_r, ref_r, rtol=1e-5, atol=1e-4), (loss_r, ref_r)
    probs = jax.nn.sigmoid(predicted_values)
    ref_c = jnp.sum(-(cls_targets * jnp.log(probs)
                      + (1.0 - cls_targets) * jnp.log(1.0 - probs)))
    assert jnp.allclose(loss_c, ref_c, rtol=1e-5, atol=1e-3), (loss_c, ref_c)

    # --- Larger case: multi-tile grid with a partial last block (exercises
    #     the unmasked full-tile fast path + tail-only mask, no tile padding). -
    N2 = 2048 * _LANE + 777
    pv2 = jax.random.normal(k4, (N2,), dtype=jnp.float32)
    rt2 = jax.random.normal(k5, (N2,), dtype=jnp.float32)
    ct2 = (jax.random.uniform(k6, (N2,)) > 0.5).astype(jnp.float32)

    reg2 = ResidualsCalculator(pv2, 'regressor')
    cls2 = ResidualsCalculator(pv2, 'classifier')
    loss_r2 = reg2.loss(rt2)
    loss_c2 = cls2.loss(ct2)
    jax.block_until_ready((loss_r2, loss_c2))

    ref_r2 = jnp.mean((pv2 - rt2) ** 2) * N2
    assert jnp.allclose(loss_r2, ref_r2, rtol=1e-4, atol=1e-1), (loss_r2, ref_r2)
    ref_c2 = jnp.sum(jnp.maximum(pv2, 0.0) - pv2 * ct2
                     + jnp.log(1.0 + jnp.exp(-jnp.abs(pv2))))
    assert jnp.allclose(loss_c2, ref_c2, rtol=1e-4, atol=1e-1), (loss_c2, ref_c2)

    print("KERNEL_OK")
</pallas_src>

<mosaic_0001>
module attributes {stable_mosaic.version = 11 : i64} {
  func.func @kernel(%arg0: i32, %arg1: i32, %arg2: memref<1xi32, #tpu.memory_space<smem>>, %arg3: memref<16x128xf32, #tpu.memory_space<vmem>>, %arg4: memref<16x128xf32, #tpu.memory_space<vmem>>, %arg5: memref<1x1xf32, #tpu.memory_space<smem>>, %arg6: memref<8x128xf32, #tpu.memory_space<vmem>>) attributes {dimension_semantics = [#tpu.dimension_semantics<arbitrary>, #tpu.dimension_semantics<arbitrary>], iteration_bounds = array<i64: 1, 1>, scalar_prefetch = 1 : i64, scratch_operands = 1 : i64, tpu.core_type = #tpu.core_type<tc>, window_params = [{transform_indices = @transform_0, window_bounds = array<i64: 16, 128>}, {transform_indices = @transform_1, window_bounds = array<i64: 16, 128>}, {transform_indices = @transform_2, window_bounds = array<i64: 1, 1>}]} {
    %c0_i32 = arith.constant 0 : i32
    %0 = arith.cmpi eq, %arg1, %c0_i32 : i32
    %1 = arith.extui %0 : i1 to i32
    %c0_i32_0 = arith.constant 0 : i32
    %2 = arith.cmpi ne, %1, %c0_i32_0 : i32
    scf.if %2 {
      %cst = arith.constant 0.000000e+00 : f32
      %22 = vector.broadcast %cst : f32 to vector<8x128xf32>
      %c0_11 = arith.constant 0 : index
      %c0_12 = arith.constant 0 : index
      %23 = vector.load %arg6[%c0_11, %c0_12] : memref<8x128xf32, #tpu.memory_space<vmem>>, vector<8x128xf32>
      tpu.vector_store %arg6[%c0_11, %c0_12], %22 {strides = array<i32>} : memref<8x128xf32, #tpu.memory_space<vmem>>, vector<8x128xf32>,
    } else {
    }
    %c0 = arith.constant 0 : index
    %c0_1 = arith.constant 0 : index
    %3 = vector.load %arg3[%c0, %c0_1] : memref<16x128xf32, #tpu.memory_space<vmem>>, vector<16x128xf32>
    %c0_2 = arith.constant 0 : index
    %c0_3 = arith.constant 0 : index
    %4 = vector.load %arg4[%c0_2, %c0_3] : memref<16x128xf32, #tpu.memory_space<vmem>>, vector<16x128xf32>
    %5 = arith.subf %3, %4 : vector<16x128xf32>
    %6 = arith.mulf %5, %5 : vector<16x128xf32>
    %c0_4 = arith.constant 0 : index
    %7 = memref.load %arg2[%c0_4] : memref<1xi32, #tpu.memory_space<smem>>
    %c1_i32 = arith.constant 1 : i32
    %8 = arith.muli %arg0, %c1_i32 : i32
    %9 = arith.addi %8, %arg1 : i32
    %c2048_i32 = arith.constant 2048 : i32
    %10 = arith.muli %9, %c2048_i32 : i32
    %c2048_i32_5 = arith.constant 2048 : i32
    %11 = arith.addi %10, %c2048_i32_5 : i32
    %12 = arith.cmpi sle, %11, %7 : i32
    %13 = arith.extui %12 : i1 to i32
    %c0_i32_6 = arith.constant 0 : i32
    %14 = arith.cmpi ne, %13, %c0_i32_6 : i32
    scf.if %14 {
      %c0_11 = arith.constant 0 : index
      %c0_12 = arith.constant 0 : index
      %22 = vector.load %arg6[%c0_11, %c0_12] : memref<8x128xf32, #tpu.memory_space<vmem>>, vector<8x128xf32>
      %23 = vector.shape_cast %6 : vector<16x128xf32> to vector<2x8x128xf32>
      %cst = arith.constant dense<0.000000e+00> : vector<8x128xf32>
      %24 = vector.multi_reduction <add>, %23, %cst [0] : vector<2x8x128xf32> to vector<8x128xf32>
      %25 = arith.addf %22, %24 : vector<8x128xf32>
      %c0_13 = arith.constant 0 : index
      %c0_14 = arith.constant 0 : index
      %26 = vector.load %arg6[%c0_13, %c0_14] : memref<8x128xf32, #tpu.memory_space<vmem>>, vector<8x128xf32>
      tpu.vector_store %arg6[%c0_13, %c0_14], %25 {strides = array<i32>} : memref<8x128xf32, #tpu.memory_space<vmem>>, vector<8x128xf32>,
    } else {
    }
    %c2048_i32_7 = arith.constant 2048 : i32
    %15 = arith.addi %10, %c2048_i32_7 : i32
    %16 = arith.cmpi sgt, %15, %7 : i32
    %17 = arith.extui %16 : i1 to i32
    %c0_i32_8 = arith.constant 0 : i32
    %18 = arith.cmpi ne, %17, %c0_i32_8 : i32
    scf.if %18 {
      %22 = tpu.iota {dimensions = array<i32: 0>} : vector<16x128xi32>
      %23 = tpu.iota {dimensions = array<i32: 1>} : vector<16x128xi32>
      %c128_i32 = arith.constant 128 : i32
      %24 = vector.broadcast %c128_i32 : i32 to vector<16x128xi32>
      %25 = arith.muli %22, %24 : vector<16x128xi32>
      %26 = arith.addi %25, %23 : vector<16x128xi32>
      %27 = arith.subi %7, %10 : i32
      %28 = vector.broadcast %27 : i32 to vector<16x128xi32>
      %29 = arith.cmpi slt, %26, %28 : vector<16x128xi32>
      %cst = arith.constant 0.000000e+00 : f32
      %30 = vector.broadcast %cst : f32 to vector<16x128xf32>
      %31 = arith.select %29, %6, %30 : vector<16x128xi1>, vector<16x128xf32>
      %c0_11 = arith.constant 0 : index
      %c0_12 = arith.constant 0 : index
      %32 = vector.load %arg6[%c0_11, %c0_12] : memref<8x128xf32, #tpu.memory_space<vmem>>, vector<8x128xf32>
      %33 = vector.shape_cast %31 : vector<16x128xf32> to vector<2x8x128xf32>
      %cst_13 = arith.constant dense<0.000000e+00> : vector<8x128xf32>
      %34 = vector.multi_reduction <add>, %33, %cst_13 [0] : vector<2x8x128xf32> to vector<8x128xf32>
      %35 = arith.addf %32, %34 : vector<8x128xf32>
      %c0_14 = arith.constant 0 : index
      %c0_15 = arith.constant 0 : index
      %36 = vector.load %arg6[%c0_14, %c0_15] : memref<8x128xf32, #tpu.memory_space<vmem>>, vector<8x128xf32>
      tpu.vector_store %arg6[%c0_14, %c0_15], %35 {strides = array<i32>} : memref<8x128xf32, #tpu.memory_space<vmem>>, vector<8x128xf32>,
    } else {
    }
    %c0_i32_9 = arith.constant 0 : i32
    %19 = arith.cmpi eq, %arg1, %c0_i32_9 : i32
    %20 = arith.extui %19 : i1 to i32
    %c0_i32_10 = arith.constant 0 : i32
    %21 = arith.cmpi ne, %20, %c0_i32_10 : i32
    scf.if %21 {
      %c0_11 = arith.constant 0 : index
      %c0_12 = arith.constant 0 : index
      %22 = vector.load %arg6[%c0_11, %c0_12] : memref<8x128xf32, #tpu.memory_space<vmem>>, vector<8x128xf32>
      %23 = vector.shape_cast %22 : vector<8x128xf32> to vector<1x8x128xf32>
      %cst = arith.constant dense<0.000000e+00> : vector<1xf32>
      %24 = vector.multi_reduction <add>, %23, %cst [1, 2] : vector<1x8x128xf32> to vector<1xf32>
      %25 = vector.shape_cast %24 : vector<1xf32> to vector<1x1x1xf32>
      %26 = vector.extract %25[0, 0, 0] : f32 from vector<1x1x1xf32>
      %c0_13 = arith.constant 0 : index
      %c0_14 = arith.constant 0 : index
      %27 = memref.load %arg5[%c0_13, %c0_14] : memref<1x1xf32, #tpu.memory_space<smem>>
      memref.store %26, %arg5[%c0_13, %c0_14] : memref<1x1xf32, #tpu.memory_space<smem>>
    } else {
    }
    return
  }
  func.func @transform_0(%arg0: i32, %arg1: i32, %arg2: memref<1xi32, #tpu.memory_space<smem>>) -> (i32, i32) {
    %c1_i32 = arith.constant 1 : i32
    %0 = arith.muli %arg0, %c1_i32 : i32
    %1 = arith.addi %0, %arg1 : i32
    %c0_i32 = arith.constant 0 : i32
    %2 = arith.minsi %1, %c0_i32 : i32
    %c0_i32_0 = arith.constant 0 : i32
    %c0_i32_1 = arith.constant 0 : i32
    return %2, %c0_i32_0 : i32, i32
  }
  func.func @transform_1(%arg0: i32, %arg1: i32, %arg2: memref<1xi32, #tpu.memory_space<smem>>) -> (i32, i32) {
    %c1_i32 = arith.constant 1 : i32
    %0 = arith.muli %arg0, %c1_i32 : i32
    %1 = arith.addi %0, %arg1 : i32
    %c0_i32 = arith.constant 0 : i32
    %2 = arith.minsi %1, %c0_i32 : i32
    %c0_i32_0 = arith.constant 0 : i32
    %c0_i32_1 = arith.constant 0 : i32
    return %2, %c0_i32_0 : i32, i32
  }
  func.func @transform_2(%arg0: i32, %arg1: i32, %arg2: memref<1xi32, #tpu.memory_space<smem>>) -> (i32, i32) {
    %c0_i32 = arith.constant 0 : i32
    %c0_i32_0 = arith.constant 0 : i32
    %c0_i32_1 = arith.constant 0 : i32
    return %c0_i32, %c0_i32_0 : i32, i32
  }
}

</mosaic_0001>

<llo_original>
// kernel: _loss_regressor_impl.1
$region0: #{_loss_regressor_impl.1}
  #allocation0 [shape = 'u32[]', space=smem, size = 0x4, offset = 0x4, fixed_abs, tag = 'smem constant byte address 0x4 - core index']
  #allocation1 [shape = 'u32[144,128]{1,0:T(1,128)}', space=vmem, size = 0x12000, scoped, tag = 'internal scratch']
  #allocation2 [shape = 'f32[8,128]{1,0:T(8,128)}', space=vmem, size = 0x1000, scoped, tag = 'scratch operand']
  #allocation3 [shape = 's32[1]{0}', space=sflag, size = 0x4, scoped, tag = 'scoped memory for _loss_regressor_impl.1']
  #allocation4 [shape = 's32[1]{0:T(128)S(6)}', space=smem, size = 0x200, scoped, tag = 'prefetched SMEM operand 0']
  %s0 = inlined_call_operand.<no memory space> [shape: s32[1], index: 0, kind: input, shape index: {}]
  %s1 = inlined_call_operand.vmem [shape: f32[16,128], index: 1, kind: input, shape index: {}]
  %s2 = inlined_call_operand.vmem [shape: f32[16,128], index: 2, kind: input, shape index: {}]
  %s3 = inlined_call_operand.hbm [shape: f32[1,1], index: 3, kind: output, shape index: {}]
  %s4 = sld [smem:[#allocation0]]
  $region34: #{_loss_regressor_impl.1} parent=0
    _
  %s6 = ssub.s32 1, %s4
  %s7 = scalar_select 0, %s6, %s4
  %8 = sst [smem:[#allocation4]] %s0
  $region1: #{_loss_regressor_impl.1} parent=0
    #allocation5 [shape = 'u8[512]{0}', space=smem, size = 0x200, scoped, tag = 'output window, operand 0, single buffered']
    #allocation6 [shape = 's32[1]{0}', space=sflag, size = 0x4, scoped, tag = 'scoped memory for _loss_regressor_impl.1']
    %9 = vsyncpa [#allocation6], 0
    // Predicated region
    $region2: #{_loss_regressor_impl.1} parent=1 // pred_check
      _
    $region3: #{_loss_regressor_impl.1} parent=1 // pred_check_branch
      %11 = sbr.rel (0) target = $region5
    $region4: #{_loss_regressor_impl.1} parent=1 // pred_region
      %s12 = sadd.s32 0, 0
      %p13 = scmp.lt.s32.totalorder %s12, 0
      %s14 = scalar_select %p13, %s12, 0
      %s15 = smul.u32 2, %s14
      %p16 = scmp.lt.s32.totalorder %s15, 1
      %s17 = scalar_select %p16, %s15, 1
      %s18 = smul.addr %s17, 8
      %s19 = scalar_lea.vmem %s1, %s18
      %s20 = sadd.s32 0, 0
      %p21 = scmp.lt.s32.totalorder %s20, 0
      %s22 = scalar_select %p21, %s20, 0
      %s23 = smul.u32 2, %s22
    $region5: #{_loss_regressor_impl.1} parent=1 // pred_fallthru
      _
    // Predicated region
    $region6: #{_loss_regressor_impl.1} parent=1 // pred_check
      _
    $region7: #{_loss_regressor_impl.1} parent=1 // pred_check_branch
      %25 = sbr.rel (0) target = $region9
    $region8: #{_loss_regressor_impl.1} parent=1 // pred_region
      %s26 = sadd.s32 0, 0
      %p27 = scmp.lt.s32.totalorder %s26, 0
      %s28 = scalar_select %p27, %s26, 0
      %s29 = smul.u32 2, %s28
      %p30 = scmp.lt.s32.totalorder %s29, 1
      %s31 = scalar_select %p30, %s29, 1
      %s32 = smul.addr %s31, 8
      %s33 = scalar_lea.vmem %s2, %s32
      %s34 = sadd.s32 0, 0
      %p35 = scmp.lt.s32.totalorder %s34, 0
      %s36 = scalar_select %p35, %s34, 0
      %s37 = smul.u32 2, %s36
    $region9: #{_loss_regressor_impl.1} parent=1 // pred_fallthru
      _
    %s38 = sadd.s32 0, 0
    %p39 = scmp.lt.s32.totalorder %s38, 0
    %s40 = scalar_select %p39, %s38, 0
    %s41 = smul.u32 2, %s40
    %p42 = scmp.lt.s32.totalorder %s41, 1
    %s43 = scalar_select %p42, %s41, 1
    %s44 = smul.addr %s43, 8
    %s45 = scalar_lea.vmem %s1, %s44
    %s46 = sadd.s32 0, 0
    %p47 = scmp.lt.s32.totalorder %s46, 0
    %s48 = scalar_select %p47, %s46, 0
    %s49 = smul.u32 2, %s48
    %p50 = scmp.lt.s32.totalorder %s49, 1
    %s51 = scalar_select %p50, %s49, 1
    %s52 = smul.addr %s51, 8
    %s53 = scalar_lea.vmem %s2, %s52
    %s54 = sadd.s32 0, 0
    %p55 = scmp.lt.s32.totalorder %s54, 0
    %s56 = scalar_select %p55, %s54, 0
    %s57 = smul.u32 2, %s56
    %p58 = scmp.lt.s32.totalorder %s57, 1
    %s59 = scalar_select %p58, %s57, 1
    %s60 = smul.addr %s59, 8
    %s61 = scalar_lea.vmem %s1, %s60
    %s62 = sadd.s32 0, 0
    %p63 = scmp.lt.s32.totalorder %s62, 0
    %s64 = scalar_select %p63, %s62, 0
    %s65 = smul.u32 2, %s64
    %s66 = sadd.s32 0, 0
    %p67 = scmp.lt.s32.totalorder %s66, 0
    %s68 = scalar_select %p67, %s66, 0
    %s69 = smul.u32 2, %s68
    %p70 = scmp.lt.s32.totalorder %s69, 1
    %s71 = scalar_select %p70, %s69, 1
    %s72 = smul.addr %s71, 8
    %s73 = scalar_lea.vmem %s2, %s72
    %s74 = sadd.s32 0, 0
    %p75 = scmp.lt.s32.totalorder %s74, 0
    %s76 = scalar_select %p75, %s74, 0
    %s77 = smul.u32 2, %s76
    %p78 = scmp.eq.s32.totalorder 0, 0
    // Predicated region
    $region10: #{_loss_regressor_impl.1} parent=1 // pred_check
      %p79 = pneg %p78
    $region11: #{_loss_regressor_impl.1} parent=1 // pred_check_branch
      %81 = sbr.rel (%p79) target = $region13
    $region12: #{_loss_regressor_impl.1} parent=1 // pred_region
      %82 = vst [vmem:[#allocation2] sm:$0xff] 0.0
    $region13: #{_loss_regressor_impl.1} parent=1 // pred_fallthru
      _
    %v83 = vld [vmem:[%s61] sm:$0xff]
    %v84 = vld [vmem:[%s61 + $0x8] sm:$0xff]
    %v85 = vld [vmem:[%s73] sm:$0xff]
    %v86 = vld [vmem:[%s73 + $0x8] sm:$0xff]
    %v87 = vsub.f32 %v83, %v85
    %v88 = vsub.f32 %v84, %v86
    %v89 = vmul.f32 %v87, %v87
    %v90 = vmul.f32 %v88, %v88
    %s91 = sld [smem:[#allocation4]]
    %s92 = sadd.s32 0, 0
    %s93 = smul.u32 %s92, 2048
    %s94 = sadd.s32 %s93, 2048
    %p95 = scmp.le.s32.totalorder %s94, %s91
    // Predicated region
    $region14: #{_loss_regressor_impl.1} parent=1 // pred_check
      %p96 = pneg %p95
    $region15: #{_loss_regressor_impl.1} parent=1 // pred_check_branch
      %98 = sbr.rel (%p96) target = $region17
    $region16: #{_loss_regressor_impl.1} parent=1 // pred_region
      %v99 = vld [vmem:[#allocation2] sm:$0xff]
      %v100 = vadd.f32 %v89, %v90
      %v101 = vadd.f32 %v99, %v100
      %102 = vst [vmem:[#allocation2] sm:$0xff] %v101
    $region17: #{_loss_regressor_impl.1} parent=1 // pred_fallthru
      _
    %p103 = scmp.gt.s32.totalorder %s94, %s91
    // Predicated region
    $region18: #{_loss_regressor_impl.1} parent=1 // pred_check
      %p104 = pneg %p103
    $region19: #{_loss_regressor_impl.1} parent=1 // pred_check_branch
      %106 = sbr.rel (%p104) target = $region21
    $region20: #{_loss_regressor_impl.1} parent=1 // pred_region
      %v107 = vlaneseq
      %v108 = vshrl.u32 %v107, 7
      %v109 = vadd.s32 %v108, 8
      %v110 = vlaneseq
      %v111 = vand.u32 %v110, 127
      %v112 = vmul.u32 %v108, 128
      %v113 = vmul.u32 %v109, 128
      %v114 = vadd.s32 %v112, %v111
      %v115 = vadd.s32 %v113, %v111
      %s116 = ssub.s32 %s91, %s93
      %v117 = vstv %s116
      %vm118 = vcmp.lt.s32.totalorder %v114, %v117
      %vm119 = vcmp.lt.s32.totalorder %v115, %v117
      %v120 = vsel %vm118, %v89, 0.0
      %v121 = vsel %vm119, %v90, 0.0
      %v122 = vld [vmem:[#allocation2] sm:$0xff]
      %v123 = vadd.f32 %v120, %v121
      %v124 = vadd.f32 %v122, %v123
      %125 = vst [vmem:[#allocation2] sm:$0xff] %v124
    $region21: #{_loss_regressor_impl.1} parent=1 // pred_fallthru
      _
    // Predicated region
    $region22: #{_loss_regressor_impl.1} parent=1 // pred_check
      %p126 = pneg %p78
    $region23: #{_loss_regressor_impl.1} parent=1 // pred_check_branch
      %128 = sbr.rel (%p126) target = $region25
    $region24: #{_loss_regressor_impl.1} parent=1 // pred_region
      %v129 = vld [vmem:[#allocation2] sm:$0xff]
      %130 = vadd.xlane.f32.xlu0 %v129
      %v131 = vpop.xlane.xlu0 %130
      %v132 = vrot.slane %v131, 4
      %v133 = vadd.f32 %v131, %v132
      %v134 = vrot.slane %v133, 2
      %v135 = vadd.f32 %v133, %v134
      %v136 = vrot.slane %v135, 1
      %v137 = vadd.f32 %v135, %v136
      %s138 = vtos %v137
      %s139 = scalar_lea.smem [#allocation5], 0
      %140 = sst [smem:[%s139]] %s138
    $region25: #{_loss_regressor_impl.1} parent=1 // pred_fallthru
      _
    // Predicated region
    $region26: #{_loss_regressor_impl.1} parent=1 // pred_check
      _
    $region27: #{_loss_regressor_impl.1} parent=1 // pred_check_branch
      %142 = sbr.rel (0) target = $region29
    $region28: #{_loss_regressor_impl.1} parent=1 // pred_region
      %s144 = ssub.s32 16, 16
      %145 = vsyncadd [#allocation6], %s144
      %148 = dma.smem_to_hbm [#allocation5], 16, %s3, [#allocation6]
    $region29: #{_loss_regressor_impl.1} parent=1 // pred_fallthru
      _
    // Predicated region
    $region30: #{_loss_regressor_impl.1} parent=1 // pred_check
      _
    $region31: #{_loss_regressor_impl.1} parent=1 // pred_check_branch
      %150 = sbr.rel (0) target = $region33
    $region32: #{_loss_regressor_impl.1} parent=1 // pred_region
      %151 = dma.done [#allocation6], 16
    $region33: #{_loss_regressor_impl.1} parent=1 // pred_fallthru
      _
    %152 = sfence
    %153 = vsyncpa [#allocation6], 1

</llo_original>
